<compile_context>
chip_gen: v6e
topology: v6e:2x2x1
jax: 0.10.0
libtpu: 0.0.40
codegen_flags: <defaults>
</compile_context>

<pallas_src>
import functools

import numpy as np
import jax
import jax.numpy as jnp
from jax.experimental import pallas as pl
from jax.experimental.pallas import tpu as pltpu

SHIFT_OFFSETS = (-1, 0, 1, 2)  # integer taps realizing the fractional (bilinear) shift


# ----------------------------- Pallas kernel ------------------------------- #
def _csc_kernel(row_stride, batch_block, e_channels, fuse_cat,
                x_ref, w1_ref, b1_ref, wm_y_ref, wm_x_ref, w2_ref, b2_ref, o_ref):
    lanes = x_ref.shape[-1]

    # Small constants loaded once per grid step.
    w1 = w1_ref[...]           # (E, Cin)
    b1 = b1_ref[...]           # (E, 1)   f32
    w2 = w2_ref[...]           # (Cout_pad, E + Cin)
    b2 = b2_ref[...]           # (Cout_pad, 1) f32

    # ASL: separable per-channel bilinear translation with zero padding.
    # result[c, i] = sum_k wm[k, c, i] * a[c, i + s_k * stride]; wm already folds the
    # per-channel tap weight and the static boundary mask -> one VPU mul per tap.
    def apply_taps(a, wm_ref, stride):
        acc = None
        for k, s in enumerate(SHIFT_OFFSETS):
            src = a if s == 0 else pltpu.roll(a, (-s * stride) % lanes, axis=1)
            contrib = wm_ref[k] * src
            acc = contrib if acc is None else acc + contrib
        return acc

    # Static unroll over the images packed into this grid step.
    for b in range(batch_block):
        x = x_ref[b]                                              # (Cin, lanes)

        # 1x1 conv + folded BatchNorm + ReLU  (MXU, f32 accumulation).
        y = jnp.dot(w1, x, preferred_element_type=jnp.float32) + b1
        y = jnp.maximum(y, 0.0)                                   # (E, lanes) f32

        tmp = apply_taps(y, wm_y_ref, row_stride)                 # vertical (H) taps
        shifted = apply_taps(tmp, wm_x_ref, 1)                    # horizontal (W) taps

        # Residual concat + final 1x1 conv.
        if fuse_cat:
            # E is sublane-aligned for this dtype -> concat costs no repack and the two
            # dots collapse into one MXU matmul.
            cat = jnp.concatenate([shifted.astype(x.dtype), x], axis=0)
            out = jnp.dot(w2, cat, preferred_element_type=jnp.float32) + b2
        else:
            out = (jnp.dot(w2[:, :e_channels], shifted.astype(w2.dtype),
                           preferred_element_type=jnp.float32)
                   + jnp.dot(w2[:, e_channels:], x,
                             preferred_element_type=jnp.float32)
                   + b2)
        o_ref[b] = out                                            # lane-dense f32 store


# ------------------------------ glue / wrapper ------------------------------ #
def _shift_tap_weights(t):
    """Per-channel weights of the integer taps realizing translation by t."""
    a = -t.astype(jnp.float32)                # sample-position offset
    o = jnp.floor(a)
    f = a - o                                 # fractional part
    offs = jnp.asarray(SHIFT_OFFSETS, jnp.float32)[:, None]       # (4, 1)
    w = jnp.where(offs == o[None, :], 1.0 - f[None, :],
                  jnp.where(offs == o[None, :] + 1.0, f[None, :], 0.0))
    return w                                  # (4, E)


def _boundary_masks(H, W, padded_len):
    """Static 0/1 masks (flattened, lane-padded pixel axis) of in-range taps."""
    hh = np.broadcast_to(np.arange(H)[:, None], (H, W))
    ww = np.broadcast_to(np.arange(W)[None, :], (H, W))

    def build(coord, extent):
        m = np.stack([((coord + s >= 0) & (coord + s < extent)).reshape(H * W)
                      for s in SHIFT_OFFSETS]).astype(np.float32)       # (4, HW)
        if padded_len > H * W:
            m = np.pad(m, ((0, 0), (0, padded_len - H * W)))            # pad lanes -> 0
        return m

    return build(hh, H), build(ww, W)


def _choose_batch_block(N, lanes_per_image, lane_target=2048, max_lanes=16384):
    """Images packed per grid step: fatten lanes to amortize per-step overhead, keep
    >= 2 grid steps when N allows (v7x two-TensorCore sharding), cap lane width."""
    best = 1
    for cand in range(1, N + 1):
        if N % cand:
            continue
        if cand * lanes_per_image > max_lanes:
            break
        if N > 1 and N // cand < 2:
            break
        best = cand
        if cand * lanes_per_image >= lane_target:
            break
    return best


def init_params(key, input_size, output_size, expansion_rate):
    E = int(input_size * expansion_rate)
    ks = jax.random.split(key, 10)
    return dict(
        conv1_w=0.2 * jax.random.normal(ks[0], (E, input_size), jnp.float32),
        conv1_b=0.1 * jax.random.normal(ks[1], (E,), jnp.float32),
        bn_gamma=jax.random.uniform(ks[2], (E,), jnp.float32, 0.5, 1.5),
        bn_beta=0.1 * jax.random.normal(ks[3], (E,), jnp.float32),
        bn_mean=0.1 * jax.random.normal(ks[4], (E,), jnp.float32),
        bn_var=jax.random.uniform(ks[5], (E,), jnp.float32, 0.5, 1.5),
        shifts=jax.random.uniform(ks[6], (E, 2), jnp.float32, -1.0, 1.0),
        conv2_w=0.2 * jax.random.normal(ks[7], (output_size, E + input_size),
                                        jnp.float32),
        conv2_b=0.1 * jax.random.normal(ks[8], (output_size,), jnp.float32),
    )


def csc_block_res3_forward(x_nchw, p, eps=1e-5, compute_dtype=jnp.float32):
    N, Cin, H, W = x_nchw.shape
    E = p["conv1_w"].shape[0]
    Cout = p["conv2_w"].shape[0]
    HW = H * W
    HW_pad = ((HW + 127) // 128) * 128          # keep rolls / stores lane-dense
    Cout_pad = ((Cout + 7) // 8) * 8            # unmasked full-sublane output store
    cdt = jnp.dtype(compute_dtype)
    n_taps = len(SHIFT_OFFSETS)

    # Channels-as-sublanes / pixels-as-lanes: a pure reshape of NCHW (no transpose).
    x = x_nchw.astype(jnp.float32).reshape(N, Cin, HW)
    if HW_pad != HW:
        x = jnp.pad(x, ((0, 0), (0, 0), (0, HW_pad - HW)))
    x = x.astype(cdt)

    # Fold eval-mode BatchNorm into the first 1x1 conv.
    bn_scale = p["bn_gamma"] / jnp.sqrt(p["bn_var"] + eps)
    bn_bias = p["bn_beta"] - p["bn_mean"] * bn_scale
    w1f = (p["conv1_w"] * bn_scale[:, None]).astype(cdt)          # (E, Cin)
    b1f = (p["conv1_b"] * bn_scale + bn_bias)[:, None]            # (E, 1) f32

    # Pre-fold per-channel tap weights with the static boundary masks (one constant
    # per axis -> single VPU multiply per tap in the kernel).
    wy = _shift_tap_weights(p["shifts"][:, 1])                    # ty -> H axis
    wx = _shift_tap_weights(p["shifts"][:, 0])                    # tx -> W axis
    mh_np, mw_np = _boundary_masks(H, W, HW_pad)
    wm_y = (wy[:, :, None] * jnp.asarray(mh_np)[:, None, :]).astype(cdt)  # (4,E,HW_pad)
    wm_x = (wx[:, :, None] * jnp.asarray(mw_np)[:, None, :]).astype(cdt)  # (4,E,HW_pad)

    # Final 1x1 conv, rows padded to Cout_pad (zero rows sliced off after the call).
    w2 = p["conv2_w"]
    b2 = p["conv2_b"]
    if Cout_pad != Cout:
        w2 = jnp.pad(w2, ((0, Cout_pad - Cout), (0, 0)))
        b2 = jnp.pad(b2, ((0, Cout_pad - Cout),))
    w2 = w2.astype(cdt)                                           # (Cout_pad, E+Cin)
    b2 = b2[:, None].astype(jnp.float32)                          # (Cout_pad, 1)

    B = _choose_batch_block(N, HW_pad)
    grid = (N // B,)

    # Fuse the concat + conv2 into one MXU matmul only when E lands on a sublane tile
    # boundary for this dtype (8 rows for f32, 16 for bf16) -> no sublane repack.
    sub_mult = 8 * (4 // cdt.itemsize)
    fuse_cat = (E % sub_mult == 0)

    # Static VMEM-budget guard (blocks & constants are double-buffered by the pipeline;
    # v7x has only 64 MiB physical / 32 MiB default scoped VMEM).
    vmem_est = 2 * (B * Cin * HW_pad * cdt.itemsize
                    + B * Cout_pad * HW_pad * 4
                    + 2 * n_taps * E * HW_pad * cdt.itemsize
                    + (E * Cin + Cout_pad * (E + Cin)) * cdt.itemsize
                    + (E + Cout_pad) * 4)
    assert vmem_est < 16 * 1024 * 1024, (
        f"per-step VMEM estimate {vmem_est} too large; add a row-block grid axis")

    def const_spec(shape):
        return pl.BlockSpec(shape, lambda g: (0,) * len(shape))

    kernel = functools.partial(_csc_kernel, W, B, E, fuse_cat)

    out = pl.pallas_call(
        kernel,
        out_shape=jax.ShapeDtypeStruct((N, Cout_pad, HW_pad), jnp.float32),
        grid=grid,
        in_specs=[
            pl.BlockSpec((B, Cin, HW_pad), lambda g: (g, 0, 0)),
            const_spec((E, Cin)),
            const_spec((E, 1)),
            const_spec((n_taps, E, HW_pad)),
            const_spec((n_taps, E, HW_pad)),
            const_spec((Cout_pad, E + Cin)),
            const_spec((Cout_pad, 1)),
        ],
        out_specs=pl.BlockSpec((B, Cout_pad, HW_pad), lambda g: (g, 0, 0)),
        compiler_params=pltpu.CompilerParams(dimension_semantics=("parallel",)),
    )(x, w1f, b1f, wm_y, wm_x, w2, b2)

    return out[:, :Cout, :HW].reshape(N, Cout, H, W)              # back to NCHW


# --------------------------- pure-JAX reference ----------------------------- #
def _translate_channel_ref(img_nhw, tx, ty):
    """kornia-style bilinear translate (zeros padding) of one channel."""
    _, H, W = img_nhw.shape
    hh = jnp.arange(H, dtype=jnp.float32)[:, None]
    ww = jnp.arange(W, dtype=jnp.float32)[None, :]
    fy, fx = hh - ty, ww - tx
    y0, x0 = jnp.floor(fy), jnp.floor(fx)
    wy1, wx1 = fy - y0, fx - x0
    y0i, x0i = y0.astype(jnp.int32), x0.astype(jnp.int32)

    def gather(yy, xx):
        valid = (yy >= 0) & (yy < H) & (xx >= 0) & (xx < W)
        yyc = jnp.clip(yy, 0, H - 1)
        xxc = jnp.clip(xx, 0, W - 1)
        return jnp.where(valid[None], img_nhw[:, yyc, xxc], 0.0)

    return ((1 - wy1) * (1 - wx1) * gather(y0i, x0i)
            + (1 - wy1) * wx1 * gather(y0i, x0i + 1)
            + wy1 * (1 - wx1) * gather(y0i + 1, x0i)
            + wy1 * wx1 * gather(y0i + 1, x0i + 1))


def reference_forward(x_nchw, p, eps=1e-5):
    x = x_nchw.astype(jnp.float32)
    y = (jnp.einsum("nchw,ec->nehw", x, p["conv1_w"])
         + p["conv1_b"][None, :, None, None])
    y = ((y - p["bn_mean"][None, :, None, None])
         / jnp.sqrt(p["bn_var"][None, :, None, None] + eps)
         * p["bn_gamma"][None, :, None, None] + p["bn_beta"][None, :, None, None])
    y = jnp.maximum(y, 0.0)
    shifted = jax.vmap(_translate_channel_ref, in_axes=(1, 0, 0), out_axes=1)(
        y, p["shifts"][:, 0], p["shifts"][:, 1])
    cat = jnp.concatenate([shifted, x], axis=1)
    return (jnp.einsum("nchw,oc->nohw", cat, p["conv2_w"])
            + p["conv2_b"][None, :, None, None])


# ---------------------------------- main ------------------------------------ #
if __name__ == "__main__":
    N, Cin, H, W = 4, 4, 16, 16
    output_size, expansion_rate = 6, 2

    key = jax.random.PRNGKey(0)
    k_x, k_p = jax.random.split(key)
    x_nchw = jax.random.normal(k_x, (N, Cin, H, W), jnp.float32)
    params = init_params(k_p, Cin, output_size, expansion_rate)

    ref = reference_forward(x_nchw, params)

    # f32 path: strict check against the pure-JAX reference.
    out = jax.block_until_ready(csc_block_res3_forward(x_nchw, params))
    np.testing.assert_allclose(np.asarray(out), np.asarray(ref), rtol=1e-4, atol=1e-4)

    # bf16 weights/activations (f32 MXU accumulation): looser numeric check.
    out_bf16 = jax.block_until_ready(
        csc_block_res3_forward(x_nchw, params, compute_dtype=jnp.bfloat16))
    np.testing.assert_allclose(np.asarray(out_bf16), np.asarray(ref),
                               rtol=5e-2, atol=5e-2)

    print("KERNEL_OK")
</pallas_src>

<mosaic_0001>
module attributes {stable_mosaic.version = 11 : i64} {
  func.func @_csc_kernel(%arg0: i32, %arg1: memref<2x4x256xf32, #tpu.memory_space<vmem>>, %arg2: memref<8x4xf32, #tpu.memory_space<vmem>>, %arg3: memref<8x1xf32, #tpu.memory_space<vmem>>, %arg4: memref<4x8x256xf32, #tpu.memory_space<vmem>>, %arg5: memref<4x8x256xf32, #tpu.memory_space<vmem>>, %arg6: memref<8x12xf32, #tpu.memory_space<vmem>>, %arg7: memref<8x1xf32, #tpu.memory_space<vmem>>, %arg8: memref<2x8x256xf32, #tpu.memory_space<vmem>>) attributes {dimension_semantics = [#tpu.dimension_semantics<parallel>], iteration_bounds = array<i64: 2>, scalar_prefetch = 0 : i64, scratch_operands = 0 : i64, tpu.core_type = #tpu.core_type<tc>, window_params = [{transform_indices = @transform_0, window_bounds = array<i64: 2, 4, 256>}, {pipeline_mode = #tpu.pipeline_mode<synchronous>, transform_indices = @transform_1, window_bounds = array<i64: 8, 4>}, {pipeline_mode = #tpu.pipeline_mode<synchronous>, transform_indices = @transform_2, window_bounds = array<i64: 8, 1>}, {pipeline_mode = #tpu.pipeline_mode<synchronous>, transform_indices = @transform_3, window_bounds = array<i64: 4, 8, 256>}, {pipeline_mode = #tpu.pipeline_mode<synchronous>, transform_indices = @transform_4, window_bounds = array<i64: 4, 8, 256>}, {pipeline_mode = #tpu.pipeline_mode<synchronous>, transform_indices = @transform_5, window_bounds = array<i64: 8, 12>}, {pipeline_mode = #tpu.pipeline_mode<synchronous>, transform_indices = @transform_6, window_bounds = array<i64: 8, 1>}, {transform_indices = @transform_7, window_bounds = array<i64: 2, 8, 256>}]} {
    %c0 = arith.constant 0 : index
    %c0_0 = arith.constant 0 : index
    %0 = vector.load %arg2[%c0, %c0_0] : memref<8x4xf32, #tpu.memory_space<vmem>>, vector<8x4xf32>
    %c0_1 = arith.constant 0 : index
    %c0_2 = arith.constant 0 : index
    %1 = vector.load %arg3[%c0_1, %c0_2] : memref<8x1xf32, #tpu.memory_space<vmem>>, vector<8x1xf32>
    %c0_3 = arith.constant 0 : index
    %c0_4 = arith.constant 0 : index
    %2 = vector.load %arg6[%c0_3, %c0_4] : memref<8x12xf32, #tpu.memory_space<vmem>>, vector<8x12xf32>
    %c0_5 = arith.constant 0 : index
    %c0_6 = arith.constant 0 : index
    %3 = vector.load %arg7[%c0_5, %c0_6] : memref<8x1xf32, #tpu.memory_space<vmem>>, vector<8x1xf32>
    %c0_7 = arith.constant 0 : index
    %c0_8 = arith.constant 0 : index
    %c0_9 = arith.constant 0 : index
    %4 = vector.load %arg1[%c0_7, %c0_8, %c0_9] : memref<2x4x256xf32, #tpu.memory_space<vmem>>, vector<1x4x256xf32>
    %5 = vector.shape_cast %4 : vector<1x4x256xf32> to vector<4x256xf32>
    %cst = arith.constant dense<0.000000e+00> : vector<8x256xf32>
    %6 = tpu.matmul %0, %5, %cst {dimension_numbers = #tpu.dot_dimension_numbers<[1], [0], [0], [1], [0, 0, 1, 1], [], []>} : vector<8x4xf32>, vector<4x256xf32>, vector<8x256xf32> -> vector<8x256xf32>
    %7 = vector.broadcast %1 : vector<8x1xf32> to vector<8x256xf32>
    %8 = arith.addf %6, %7 : vector<8x256xf32>
    %cst_10 = arith.constant 0.000000e+00 : f32
    %9 = vector.broadcast %cst_10 : f32 to vector<8x256xf32>
    %10 = arith.maximumf %8, %9 : vector<8x256xf32>
    %c16_i32 = arith.constant 16 : i32
    %11 = tpu.dynamic_rotate %10 by %c16_i32 dim 1 : vector<8x256xf32>, i32 -> vector<8x256xf32>
    %c0_11 = arith.constant 0 : index
    %c0_12 = arith.constant 0 : index
    %c0_13 = arith.constant 0 : index
    %12 = vector.load %arg4[%c0_11, %c0_12, %c0_13] : memref<4x8x256xf32, #tpu.memory_space<vmem>>, vector<1x8x256xf32>
    %13 = vector.shape_cast %12 : vector<1x8x256xf32> to vector<8x256xf32>
    %14 = arith.mulf %13, %11 : vector<8x256xf32>
    %c1 = arith.constant 1 : index
    %c0_14 = arith.constant 0 : index
    %c0_15 = arith.constant 0 : index
    %15 = vector.load %arg4[%c1, %c0_14, %c0_15] : memref<4x8x256xf32, #tpu.memory_space<vmem>>, vector<1x8x256xf32>
    %16 = vector.shape_cast %15 : vector<1x8x256xf32> to vector<8x256xf32>
    %17 = arith.mulf %16, %10 : vector<8x256xf32>
    %18 = arith.addf %14, %17 : vector<8x256xf32>
    %c240_i32 = arith.constant 240 : i32
    %19 = tpu.dynamic_rotate %10 by %c240_i32 dim 1 : vector<8x256xf32>, i32 -> vector<8x256xf32>
    %c2 = arith.constant 2 : index
    %c0_16 = arith.constant 0 : index
    %c0_17 = arith.constant 0 : index
    %20 = vector.load %arg4[%c2, %c0_16, %c0_17] : memref<4x8x256xf32, #tpu.memory_space<vmem>>, vector<1x8x256xf32>
    %21 = vector.shape_cast %20 : vector<1x8x256xf32> to vector<8x256xf32>
    %22 = arith.mulf %21, %19 : vector<8x256xf32>
    %23 = arith.addf %18, %22 : vector<8x256xf32>
    %c224_i32 = arith.constant 224 : i32
    %24 = tpu.dynamic_rotate %10 by %c224_i32 dim 1 : vector<8x256xf32>, i32 -> vector<8x256xf32>
    %c3 = arith.constant 3 : index
    %c0_18 = arith.constant 0 : index
    %c0_19 = arith.constant 0 : index
    %25 = vector.load %arg4[%c3, %c0_18, %c0_19] : memref<4x8x256xf32, #tpu.memory_space<vmem>>, vector<1x8x256xf32>
    %26 = vector.shape_cast %25 : vector<1x8x256xf32> to vector<8x256xf32>
    %27 = arith.mulf %26, %24 : vector<8x256xf32>
    %28 = arith.addf %23, %27 : vector<8x256xf32>
    %c1_i32 = arith.constant 1 : i32
    %29 = tpu.dynamic_rotate %28 by %c1_i32 dim 1 : vector<8x256xf32>, i32 -> vector<8x256xf32>
    %c0_20 = arith.constant 0 : index
    %c0_21 = arith.constant 0 : index
    %c0_22 = arith.constant 0 : index
    %30 = vector.load %arg5[%c0_20, %c0_21, %c0_22] : memref<4x8x256xf32, #tpu.memory_space<vmem>>, vector<1x8x256xf32>
    %31 = vector.shape_cast %30 : vector<1x8x256xf32> to vector<8x256xf32>
    %32 = arith.mulf %31, %29 : vector<8x256xf32>
    %c1_23 = arith.constant 1 : index
    %c0_24 = arith.constant 0 : index
    %c0_25 = arith.constant 0 : index
    %33 = vector.load %arg5[%c1_23, %c0_24, %c0_25] : memref<4x8x256xf32, #tpu.memory_space<vmem>>, vector<1x8x256xf32>
    %34 = vector.shape_cast %33 : vector<1x8x256xf32> to vector<8x256xf32>
    %35 = arith.mulf %34, %28 : vector<8x256xf32>
    %36 = arith.addf %32, %35 : vector<8x256xf32>
    %c255_i32 = arith.constant 255 : i32
    %37 = tpu.dynamic_rotate %28 by %c255_i32 dim 1 : vector<8x256xf32>, i32 -> vector<8x256xf32>
    %c2_26 = arith.constant 2 : index
    %c0_27 = arith.constant 0 : index
    %c0_28 = arith.constant 0 : index
    %38 = vector.load %arg5[%c2_26, %c0_27, %c0_28] : memref<4x8x256xf32, #tpu.memory_space<vmem>>, vector<1x8x256xf32>
    %39 = vector.shape_cast %38 : vector<1x8x256xf32> to vector<8x256xf32>
    %40 = arith.mulf %39, %37 : vector<8x256xf32>
    %41 = arith.addf %36, %40 : vector<8x256xf32>
    %c254_i32 = arith.constant 254 : i32
    %42 = tpu.dynamic_rotate %28 by %c254_i32 dim 1 : vector<8x256xf32>, i32 -> vector<8x256xf32>
    %c3_29 = arith.constant 3 : index
    %c0_30 = arith.constant 0 : index
    %c0_31 = arith.constant 0 : index
    %43 = vector.load %arg5[%c3_29, %c0_30, %c0_31] : memref<4x8x256xf32, #tpu.memory_space<vmem>>, vector<1x8x256xf32>
    %44 = vector.shape_cast %43 : vector<1x8x256xf32> to vector<8x256xf32>
    %45 = arith.mulf %44, %42 : vector<8x256xf32>
    %46 = arith.addf %41, %45 : vector<8x256xf32>
    %47 = tpu.concatenate %46, %5 in 0 : vector<8x256xf32>, vector<4x256xf32> -> vector<12x256xf32>
    %cst_32 = arith.constant dense<0.000000e+00> : vector<8x256xf32>
    %48 = tpu.matmul %2, %47, %cst_32 {dimension_numbers = #tpu.dot_dimension_numbers<[1], [0], [0], [1], [0, 0, 1, 1], [], []>} : vector<8x12xf32>, vector<12x256xf32>, vector<8x256xf32> -> vector<8x256xf32>
    %49 = vector.broadcast %3 : vector<8x1xf32> to vector<8x256xf32>
    %50 = arith.addf %48, %49 : vector<8x256xf32>
    %c0_33 = arith.constant 0 : index
    %c0_34 = arith.constant 0 : index
    %c0_35 = arith.constant 0 : index
    %51 = vector.load %arg8[%c0_33, %c0_34, %c0_35] : memref<2x8x256xf32, #tpu.memory_space<vmem>>, vector<1x8x256xf32>
    %52 = vector.shape_cast %51 : vector<1x8x256xf32> to vector<8x256xf32>
    %53 = vector.shape_cast %50 : vector<8x256xf32> to vector<1x8x256xf32>
    tpu.vector_store %arg8[%c0_33, %c0_34, %c0_35], %53 {strides = array<i32>} : memref<2x8x256xf32, #tpu.memory_space<vmem>>, vector<1x8x256xf32>,
    %c1_36 = arith.constant 1 : index
    %c0_37 = arith.constant 0 : index
    %c0_38 = arith.constant 0 : index
    %54 = vector.load %arg1[%c1_36, %c0_37, %c0_38] : memref<2x4x256xf32, #tpu.memory_space<vmem>>, vector<1x4x256xf32>
    %55 = vector.shape_cast %54 : vector<1x4x256xf32> to vector<4x256xf32>
    %cst_39 = arith.constant dense<0.000000e+00> : vector<8x256xf32>
    %56 = tpu.matmul %0, %55, %cst_39 {dimension_numbers = #tpu.dot_dimension_numbers<[1], [0], [0], [1], [0, 0, 1, 1], [], []>} : vector<8x4xf32>, vector<4x256xf32>, vector<8x256xf32> -> vector<8x256xf32>
    %57 = vector.broadcast %1 : vector<8x1xf32> to vector<8x256xf32>
    %58 = arith.addf %56, %57 : vector<8x256xf32>
    %cst_40 = arith.constant 0.000000e+00 : f32
    %59 = vector.broadcast %cst_40 : f32 to vector<8x256xf32>
    %60 = arith.maximumf %58, %59 : vector<8x256xf32>
    %c16_i32_41 = arith.constant 16 : i32
    %61 = tpu.dynamic_rotate %60 by %c16_i32_41 dim 1 : vector<8x256xf32>, i32 -> vector<8x256xf32>
    %c0_42 = arith.constant 0 : index
    %c0_43 = arith.constant 0 : index
    %c0_44 = arith.constant 0 : index
    %62 = vector.load %arg4[%c0_42, %c0_43, %c0_44] : memref<4x8x256xf32, #tpu.memory_space<vmem>>, vector<1x8x256xf32>
    %63 = vector.shape_cast %62 : vector<1x8x256xf32> to vector<8x256xf32>
    %64 = arith.mulf %63, %61 : vector<8x256xf32>
    %c1_45 = arith.constant 1 : index
    %c0_46 = arith.constant 0 : index
    %c0_47 = arith.constant 0 : index
    %65 = vector.load %arg4[%c1_45, %c0_46, %c0_47] : memref<4x8x256xf32, #tpu.memory_space<vmem>>, vector<1x8x256xf32>
    %66 = vector.shape_cast %65 : vector<1x8x256xf32> to vector<8x256xf32>
    %67 = arith.mulf %66, %60 : vector<8x256xf32>
    %68 = arith.addf %64, %67 : vector<8x256xf32>
    %c240_i32_48 = arith.constant 240 : i32
    %69 = tpu.dynamic_rotate %60 by %c240_i32_48 dim 1 : vector<8x256xf32>, i32 -> vector<8x256xf32>
    %c2_49 = arith.constant 2 : index
    %c0_50 = arith.constant 0 : index
    %c0_51 = arith.constant 0 : index
    %70 = vector.load %arg4[%c2_49, %c0_50, %c0_51] : memref<4x8x256xf32, #tpu.memory_space<vmem>>, vector<1x8x256xf32>
    %71 = vector.shape_cast %70 : vector<1x8x256xf32> to vector<8x256xf32>
    %72 = arith.mulf %71, %69 : vector<8x256xf32>
    %73 = arith.addf %68, %72 : vector<8x256xf32>
    %c224_i32_52 = arith.constant 224 : i32
    %74 = tpu.dynamic_rotate %60 by %c224_i32_52 dim 1 : vector<8x256xf32>, i32 -> vector<8x256xf32>
    %c3_53 = arith.constant 3 : index
    %c0_54 = arith.constant 0 : index
    %c0_55 = arith.constant 0 : index
    %75 = vector.load %arg4[%c3_53, %c0_54, %c0_55] : memref<4x8x256xf32, #tpu.memory_space<vmem>>, vector<1x8x256xf32>
    %76 = vector.shape_cast %75 : vector<1x8x256xf32> to vector<8x256xf32>
    %77 = arith.mulf %76, %74 : vector<8x256xf32>
    %78 = arith.addf %73, %77 : vector<8x256xf32>
    %c1_i32_56 = arith.constant 1 : i32
    %79 = tpu.dynamic_rotate %78 by %c1_i32_56 dim 1 : vector<8x256xf32>, i32 -> vector<8x256xf32>
    %c0_57 = arith.constant 0 : index
    %c0_58 = arith.constant 0 : index
    %c0_59 = arith.constant 0 : index
    %80 = vector.load %arg5[%c0_57, %c0_58, %c0_59] : memref<4x8x256xf32, #tpu.memory_space<vmem>>, vector<1x8x256xf32>
    %81 = vector.shape_cast %80 : vector<1x8x256xf32> to vector<8x256xf32>
    %82 = arith.mulf %81, %79 : vector<8x256xf32>
    %c1_60 = arith.constant 1 : index
    %c0_61 = arith.constant 0 : index
    %c0_62 = arith.constant 0 : index
    %83 = vector.load %arg5[%c1_60, %c0_61, %c0_62] : memref<4x8x256xf32, #tpu.memory_space<vmem>>, vector<1x8x256xf32>
    %84 = vector.shape_cast %83 : vector<1x8x256xf32> to vector<8x256xf32>
    %85 = arith.mulf %84, %78 : vector<8x256xf32>
    %86 = arith.addf %82, %85 : vector<8x256xf32>
    %c255_i32_63 = arith.constant 255 : i32
    %87 = tpu.dynamic_rotate %78 by %c255_i32_63 dim 1 : vector<8x256xf32>, i32 -> vector<8x256xf32>
    %c2_64 = arith.constant 2 : index
    %c0_65 = arith.constant 0 : index
    %c0_66 = arith.constant 0 : index
    %88 = vector.load %arg5[%c2_64, %c0_65, %c0_66] : memref<4x8x256xf32, #tpu.memory_space<vmem>>, vector<1x8x256xf32>
    %89 = vector.shape_cast %88 : vector<1x8x256xf32> to vector<8x256xf32>
    %90 = arith.mulf %89, %87 : vector<8x256xf32>
    %91 = arith.addf %86, %90 : vector<8x256xf32>
    %c254_i32_67 = arith.constant 254 : i32
    %92 = tpu.dynamic_rotate %78 by %c254_i32_67 dim 1 : vector<8x256xf32>, i32 -> vector<8x256xf32>
    %c3_68 = arith.constant 3 : index
    %c0_69 = arith.constant 0 : index
    %c0_70 = arith.constant 0 : index
    %93 = vector.load %arg5[%c3_68, %c0_69, %c0_70] : memref<4x8x256xf32, #tpu.memory_space<vmem>>, vector<1x8x256xf32>
    %94 = vector.shape_cast %93 : vector<1x8x256xf32> to vector<8x256xf32>
    %95 = arith.mulf %94, %92 : vector<8x256xf32>
    %96 = arith.addf %91, %95 : vector<8x256xf32>
    %97 = tpu.concatenate %96, %55 in 0 : vector<8x256xf32>, vector<4x256xf32> -> vector<12x256xf32>
    %cst_71 = arith.constant dense<0.000000e+00> : vector<8x256xf32>
    %98 = tpu.matmul %2, %97, %cst_71 {dimension_numbers = #tpu.dot_dimension_numbers<[1], [0], [0], [1], [0, 0, 1, 1], [], []>} : vector<8x12xf32>, vector<12x256xf32>, vector<8x256xf32> -> vector<8x256xf32>
    %99 = vector.broadcast %3 : vector<8x1xf32> to vector<8x256xf32>
    %100 = arith.addf %98, %99 : vector<8x256xf32>
    %c1_72 = arith.constant 1 : index
    %c0_73 = arith.constant 0 : index
    %c0_74 = arith.constant 0 : index
    %101 = vector.load %arg8[%c1_72, %c0_73, %c0_74] : memref<2x8x256xf32, #tpu.memory_space<vmem>>, vector<1x8x256xf32>
    %102 = vector.shape_cast %101 : vector<1x8x256xf32> to vector<8x256xf32>
    %103 = vector.shape_cast %100 : vector<8x256xf32> to vector<1x8x256xf32>
    tpu.vector_store %arg8[%c1_72, %c0_73, %c0_74], %103 {strides = array<i32>} : memref<2x8x256xf32, #tpu.memory_space<vmem>>, vector<1x8x256xf32>,
    return
  }
  func.func @transform_0(%arg0: i32) -> (i32, i32, i32) {
    %c0_i32 = arith.constant 0 : i32
    %c0_i32_0 = arith.constant 0 : i32
    %c0_i32_1 = arith.constant 0 : i32
    return %arg0, %c0_i32, %c0_i32_0 : i32, i32, i32
  }
  func.func @transform_1(%arg0: i32) -> (i32, i32) {
    %c0_i32 = arith.constant 0 : i32
    %c0_i32_0 = arith.constant 0 : i32
    %c0_i32_1 = arith.constant 0 : i32
    return %c0_i32, %c0_i32_0 : i32, i32
  }
  func.func @transform_2(%arg0: i32) -> (i32, i32) {
    %c0_i32 = arith.constant 0 : i32
    %c0_i32_0 = arith.constant 0 : i32
    %c0_i32_1 = arith.constant 0 : i32
    return %c0_i32, %c0_i32_0 : i32, i32
  }
  func.func @transform_3(%arg0: i32) -> (i32, i32, i32) {
    %c0_i32 = arith.constant 0 : i32
    %c0_i32_0 = arith.constant 0 : i32
    %c0_i32_1 = arith.constant 0 : i32
    %c0_i32_2 = arith.constant 0 : i32
    return %c0_i32, %c0_i32_0, %c0_i32_1 : i32, i32, i32
  }
  func.func @transform_4(%arg0: i32) -> (i32, i32, i32) {
    %c0_i32 = arith.constant 0 : i32
    %c0_i32_0 = arith.constant 0 : i32
    %c0_i32_1 = arith.constant 0 : i32
    %c0_i32_2 = arith.constant 0 : i32
    return %c0_i32, %c0_i32_0, %c0_i32_1 : i32, i32, i32
  }
  func.func @transform_5(%arg0: i32) -> (i32, i32) {
    %c0_i32 = arith.constant 0 : i32
    %c0_i32_0 = arith.constant 0 : i32
    %c0_i32_1 = arith.constant 0 : i32
    return %c0_i32, %c0_i32_0 : i32, i32
  }
  func.func @transform_6(%arg0: i32) -> (i32, i32) {
    %c0_i32 = arith.constant 0 : i32
    %c0_i32_0 = arith.constant 0 : i32
    %c0_i32_1 = arith.constant 0 : i32
    return %c0_i32, %c0_i32_0 : i32, i32
  }
  func.func @transform_7(%arg0: i32) -> (i32, i32, i32) {
    %c0_i32 = arith.constant 0 : i32
    %c0_i32_0 = arith.constant 0 : i32
    %c0_i32_1 = arith.constant 0 : i32
    return %arg0, %c0_i32, %c0_i32_0 : i32, i32, i32
  }
}

</mosaic_0001>

<llo_original>
// kernel: tpu_custom_call.1
$region0: #{tpu_custom_call.1}
  #allocation0 [shape = 'u32[]', space=smem, size = 0x4, offset = 0x4, fixed_abs, tag = 'smem constant byte address 0x4 - core index']
  #allocation1 [shape = 'u32[144,128]{1,0:T(1,128)}', space=vmem, size = 0x12000, scoped, tag = 'internal scratch']
  %s0 = inlined_call_operand.hbm [shape: f32[4,4,256], index: 0, kind: input, shape index: {}]
  %s1 = inlined_call_operand.vmem [shape: f32[8,4], index: 1, kind: input, shape index: {}]
  %s2 = inlined_call_operand.vmem [shape: f32[8,1], index: 2, kind: input, shape index: {}]
  %s3 = inlined_call_operand.hbm [shape: f32[4,8,256], index: 3, kind: input, shape index: {}]
  %s4 = inlined_call_operand.hbm [shape: f32[4,8,256], index: 4, kind: input, shape index: {}]
  %s5 = inlined_call_operand.vmem [shape: f32[8,12], index: 5, kind: input, shape index: {}]
  %s6 = inlined_call_operand.vmem [shape: f32[8,1], index: 6, kind: input, shape index: {}]
  %s7 = inlined_call_operand.hbm [shape: f32[4,8,256], index: 7, kind: output, shape index: {}]
  %s8 = sld [smem:[#allocation0]]
  $region73: #{tpu_custom_call.1} parent=0
    _
  %s10 = ssub.s32 1, %s8
  %s11 = scalar_select 0, %s10, %s8
  $region1: #{tpu_custom_call.1} parent=0
    #allocation2 [shape = 'u8[16384]{0}', space=vmem, size = 0x4000, scoped, tag = 'input window, operand 0']
    #allocation3 [shape = 's32[2]{0}', space=sflag, size = 0x8, scoped, tag = 'scoped memory for tpu_custom_call.1']
    #allocation4 [shape = 's32[2]{0}', space=sflag, size = 0x8, scoped, tag = 'scoped memory for tpu_custom_call.1']
    #allocation5 [shape = 'u8[32768]{0}', space=vmem, size = 0x8000, scoped, tag = 'input window, operand 3, single buffered']
    #allocation6 [shape = 's32[1]{0}', space=sflag, size = 0x4, scoped, tag = 'scoped memory for tpu_custom_call.1']
    #allocation7 [shape = 'u8[32768]{0}', space=vmem, size = 0x8000, scoped, tag = 'input window, operand 4, single buffered']
    #allocation8 [shape = 'u8[32768]{0}', space=vmem, size = 0x8000, scoped, tag = 'output window, operand 0']
    %12 = vsyncpa [#allocation3], 0
    %s13 = scalar_lea.sflag [#allocation3], 1
    %14 = vsyncpa %s13, 0
    %15 = vsyncpa [#allocation6], 0
    %16 = vsyncpa [#allocation4], 0
    %s17 = scalar_lea.sflag [#allocation4], 1
    %18 = vsyncpa %s17, 0
    loop: start=0, step=1, limit=4
    $region2: #{tpu_custom_call.1} parent=1 // loop_pre_header
      _
    $region3: #{tpu_custom_call.1} parent=1 // loop_header
      %s20 = sphi 0, %s24
      %p21 = scmp.ge.s32.totalorder %s20, 4
      %s30 = sphi 0, %s32
      %s33 = sphi 0, %s30
      %s34 = sphi 0, %s33
      %s50 = sphi 0, %s34
      %s54 = sphi 0, %s54
      %s56 = sphi 0, %s54
      %s57 = sphi 0, %s56
      %s71 = sphi 0, %s57
      %s75 = sphi 0, %s75
      %s77 = sphi 0, %s75
      %s78 = sphi 0, %s77
      %s92 = sphi 0, %s78
      %s96 = sphi 0, %s96
      %s98 = sphi 0, %s96
      %s99 = sphi 0, %s98
      %s113 = sphi 0, %s99
      %s117 = sphi 0, %s117
      %s119 = sphi 0, %s117
      %s120 = sphi 0, %s119
      %s134 = sphi 0, %s120
      %s138 = sphi 0, %s138
      %s140 = sphi 0, %s138
      %s141 = sphi 0, %s140
      %s155 = sphi 0, %s141
      %s159 = sphi 0, %s159
      %s161 = sphi 0, %s159
      %s162 = sphi 0, %s161
      %s176 = sphi 0, %s162
      %s182 = sphi 0, %s184
      %s185 = sphi 0, %s182
      %s186 = sphi 0, %s185
      %s202 = sphi 0, %s186
    $region4: #{tpu_custom_call.1} parent=1 // loop_header_branch
      %23 = sbr.rel (%p21) target = $region8
    $region5: #{tpu_custom_call.1} parent=1 // loop_body
      %s25 = ssub.s32 %s20, 1
      %s26 = ssub.s32 %s20, 2
      %s27 = sadd.s32 %s20, 1
      %s28 = ssub.s32 %s20, %s27
      %p29 = scmp.eq.s32.totalorder %s28, 0
      %s31 = sadd.s32 %s30, 1
      %s32 = scalar_select %p29, %s30, %s31
      %p35 = pneg %p29
      %p36 = scmp.eq.s32.totalorder %s20, 1
      %p37 = por %p35, %p36
      %p38 = scmp.ne.s32.totalorder %s30, %s33
      %p39 = scmp.eq.s32.totalorder %s20, 0
      %p40 = por %p38, %p39
      %p41 = scmp.ne.s32.totalorder %s30, %s33
      %p42 = scmp.eq.s32.totalorder %s25, 1
      %p43 = por %p41, %p42
      %p44 = scmp.ne.s32.totalorder %s33, %s34
      %p45 = scmp.eq.s32.totalorder %s25, 0
      %p46 = por %p44, %p45
      %p47 = scmp.ne.s32.totalorder %s33, %s34
      %p48 = scmp.eq.s32.totalorder %s26, 1
      %p49 = por %p47, %p48
      %p51 = scmp.ne.s32.totalorder %s34, %s50
      %p52 = scmp.eq.s32.totalorder %s26, 0
      %p53 = por %p51, %p52
      %s55 = sadd.s32 %s54, 1
      %p58 = scmp.eq.s32.totalorder %s20, 1
      %p59 = scmp.ne.s32.totalorder %s54, %s56
      %p60 = scmp.eq.s32.totalorder %s20, 0
      %p61 = por %p59, %p60
      %p62 = scmp.ne.s32.totalorder %s54, %s56
      %p63 = scmp.eq.s32.totalorder %s25, 1
      %p64 = por %p62, %p63
      %p65 = scmp.ne.s32.totalorder %s56, %s57
      %p66 = scmp.eq.s32.totalorder %s25, 0
      %p67 = por %p65, %p66
      %p68 = scmp.ne.s32.totalorder %s56, %s57
      %p69 = scmp.eq.s32.totalorder %s26, 1
      %p70 = por %p68, %p69
      %p72 = scmp.ne.s32.totalorder %s57, %s71
      %p73 = scmp.eq.s32.totalorder %s26, 0
      %p74 = por %p72, %p73
      %s76 = sadd.s32 %s75, 1
      %p79 = scmp.eq.s32.totalorder %s20, 1
      %p80 = scmp.ne.s32.totalorder %s75, %s77
      %p81 = scmp.eq.s32.totalorder %s20, 0
      %p82 = por %p80, %p81
      %p83 = scmp.ne.s32.totalorder %s75, %s77
      %p84 = scmp.eq.s32.totalorder %s25, 1
      %p85 = por %p83, %p84
      %p86 = scmp.ne.s32.totalorder %s77, %s78
      %p87 = scmp.eq.s32.totalorder %s25, 0
      %p88 = por %p86, %p87
      %p89 = scmp.ne.s32.totalorder %s77, %s78
      %p90 = scmp.eq.s32.totalorder %s26, 1
      %p91 = por %p89, %p90
      %p93 = scmp.ne.s32.totalorder %s78, %s92
      %p94 = scmp.eq.s32.totalorder %s26, 0
      %p95 = por %p93, %p94
      %s97 = sadd.s32 %s96, 1
      %p100 = scmp.eq.s32.totalorder %s20, 1
      %p101 = scmp.ne.s32.totalorder %s96, %s98
      %p102 = scmp.eq.s32.totalorder %s20, 0
      %p103 = por %p101, %p102
      %p104 = scmp.ne.s32.totalorder %s96, %s98
      %p105 = scmp.eq.s32.totalorder %s25, 1
      %p106 = por %p104, %p105
      %p107 = scmp.ne.s32.totalorder %s98, %s99
      %p108 = scmp.eq.s32.totalorder %s25, 0
      %p109 = por %p107, %p108
      %p110 = scmp.ne.s32.totalorder %s98, %s99
      %p111 = scmp.eq.s32.totalorder %s26, 1
      %p112 = por %p110, %p111
      %p114 = scmp.ne.s32.totalorder %s99, %s113
      %p115 = scmp.eq.s32.totalorder %s26, 0
      %p116 = por %p114, %p115
      %s118 = sadd.s32 %s117, 1
      %p121 = scmp.eq.s32.totalorder %s20, 1
      %p122 = scmp.ne.s32.totalorder %s117, %s119
      %p123 = scmp.eq.s32.totalorder %s20, 0
      %p124 = por %p122, %p123
      %p125 = scmp.ne.s32.totalorder %s117, %s119
      %p126 = scmp.eq.s32.totalorder %s25, 1
      %p127 = por %p125, %p126
      %p128 = scmp.ne.s32.totalorder %s119, %s120
      %p129 = scmp.eq.s32.totalorder %s25, 0
      %p130 = por %p128, %p129
      %p131 = scmp.ne.s32.totalorder %s119, %s120
      %p132 = scmp.eq.s32.totalorder %s26, 1
      %p133 = por %p131, %p132
      %p135 = scmp.ne.s32.totalorder %s120, %s134
      %p136 = scmp.eq.s32.totalorder %s26, 0
      %p137 = por %p135, %p136
      %s139 = sadd.s32 %s138, 1
      %p142 = scmp.eq.s32.totalorder %s20, 1
      %p143 = scmp.ne.s32.totalorder %s138, %s140
      %p144 = scmp.eq.s32.totalorder %s20, 0
      %p145 = por %p143, %p144
      %p146 = scmp.ne.s32.totalorder %s138, %s140
      %p147 = scmp.eq.s32.totalorder %s25, 1
      %p148 = por %p146, %p147
      %p149 = scmp.ne.s32.totalorder %s140, %s141
      %p150 = scmp.eq.s32.totalorder %s25, 0
      %p151 = por %p149, %p150
      %p152 = scmp.ne.s32.totalorder %s140, %s141
      %p153 = scmp.eq.s32.totalorder %s26, 1
      %p154 = por %p152, %p153
      %p156 = scmp.ne.s32.totalorder %s141, %s155
      %p157 = scmp.eq.s32.totalorder %s26, 0
      %p158 = por %p156, %p157
      %s160 = sadd.s32 %s159, 1
      %p163 = scmp.eq.s32.totalorder %s20, 1
      %p164 = scmp.ne.s32.totalorder %s159, %s161
      %p165 = scmp.eq.s32.totalorder %s20, 0
      %p166 = por %p164, %p165
      %p167 = scmp.ne.s32.totalorder %s159, %s161
      %p168 = scmp.eq.s32.totalorder %s25, 1
      %p169 = por %p167, %p168
      %p170 = scmp.ne.s32.totalorder %s161, %s162
      %p171 = scmp.eq.s32.totalorder %s25, 0
      %p172 = por %p170, %p171
      %p173 = scmp.ne.s32.totalorder %s161, %s162
      %p174 = scmp.eq.s32.totalorder %s26, 1
      %p175 = por %p173, %p174
      %p177 = scmp.ne.s32.totalorder %s162, %s176
      %p178 = scmp.eq.s32.totalorder %s26, 0
      %p179 = por %p177, %p178
      %s180 = ssub.s32 %s20, %s27
      %p181 = scmp.eq.s32.totalorder %s180, 0
      %s183 = sadd.s32 %s182, 1
      %s184 = scalar_select %p181, %s182, %s183
      %p187 = pneg %p181
      %p188 = scmp.eq.s32.totalorder %s20, 1
      %p189 = por %p187, %p188
      %p190 = scmp.ne.s32.totalorder %s182, %s185
      %p191 = scmp.eq.s32.totalorder %s20, 0
      %p192 = por %p190, %p191
      %p193 = scmp.ne.s32.totalorder %s182, %s185
      %p194 = scmp.eq.s32.totalorder %s25, 1
      %p195 = por %p193, %p194
      %p196 = scmp.ne.s32.totalorder %s185, %s186
      %p197 = scmp.eq.s32.totalorder %s25, 0
      %p198 = por %p196, %p197
      %p199 = scmp.ne.s32.totalorder %s185, %s186
      %p200 = scmp.eq.s32.totalorder %s26, 1
      %p201 = por %p199, %p200
      %p203 = scmp.ne.s32.totalorder %s186, %s202
      %p204 = scmp.eq.s32.totalorder %s26, 0
      %p205 = por %p203, %p204
      %p206 = scmp.le.s32.totalorder 1, %s20
      %p207 = scmp.lt.s32.totalorder %s20, 3
      %p208 = pnand %p206, %p207
      %p209 = pneg %p208
      // Predicated region
      $region9: #{tpu_custom_call.1} parent=5 // pred_check
        _
      $region10: #{tpu_custom_call.1} parent=5 // pred_check_branch
        %211 = sbr.rel (%p208) target = $region12
      $region11: #{tpu_custom_call.1} parent=5 // pred_region
        %s212 = ssub.s32 %s20, 1
        // Predicated region
        $region13: #{tpu_custom_call.1} parent=11 // pred_check
          %p213 = pneg %p67
        $region14: #{tpu_custom_call.1} parent=11 // pred_check_branch
          %215 = sbr.rel (%p213) target = $region16
        $region15: #{tpu_custom_call.1} parent=11 // pred_region
          _
        $region16: #{tpu_custom_call.1} parent=11 // pred_fallthru
          _
        // Predicated region
        $region17: #{tpu_custom_call.1} parent=11 // pred_check
          %p216 = pneg %p88
        $region18: #{tpu_custom_call.1} parent=11 // pred_check_branch
          %218 = sbr.rel (%p216) target = $region20
        $region19: #{tpu_custom_call.1} parent=11 // pred_region
          _
        $region20: #{tpu_custom_call.1} parent=11 // pred_fallthru
          _
        // Predicated region
        $region21: #{tpu_custom_call.1} parent=11 // pred_check
          %p219 = pneg %p109
        $region22: #{tpu_custom_call.1} parent=11 // pred_check_branch
          %221 = sbr.rel (%p219) target = $region24
        $region23: #{tpu_custom_call.1} parent=11 // pred_region
          %s223 = ssub.s32 1024, 1024
          %224 = vsyncadd [#allocation6], %s223
          %s225 = sshll.u32 [#allocation5], 4
          %s226 = int_to_ptr.vmem [resolvable:$true] %s225
          %231 = dma.hbm_to_vmem [thread:$0]  %s3, 1024, %s226, [#allocation6], 256, 256, 16
        $region24: #{tpu_custom_call.1} parent=11 // pred_fallthru
          _
        // Predicated region
        $region25: #{tpu_custom_call.1} parent=11 // pred_check
          %p232 = pneg %p130
        $region26: #{tpu_custom_call.1} parent=11 // pred_check_branch
          %234 = sbr.rel (%p232) target = $region28
        $region27: #{tpu_custom_call.1} parent=11 // pred_region
          %s236 = ssub.s32 1024, 1024
          %237 = vsyncadd [#allocation6], %s236
          %s238 = sshll.u32 [#allocation7], 4
          %s239 = int_to_ptr.vmem [resolvable:$true] %s238
          %244 = dma.hbm_to_vmem [thread:$0]  %s4, 1024, %s239, [#allocation6], 256, 256, 16
        $region28: #{tpu_custom_call.1} parent=11 // pred_fallthru
          _
        // Predicated region
        $region29: #{tpu_custom_call.1} parent=11 // pred_check
          %p245 = pneg %p151
        $region30: #{tpu_custom_call.1} parent=11 // pred_check_branch
          %247 = sbr.rel (%p245) target = $region32
        $region31: #{tpu_custom_call.1} parent=11 // pred_region
          _
        $region32: #{tpu_custom_call.1} parent=11 // pred_fallthru
          _
        // Predicated region
        $region33: #{tpu_custom_call.1} parent=11 // pred_check
          %p248 = pneg %p172
        $region34: #{tpu_custom_call.1} parent=11 // pred_check_branch
          %250 = sbr.rel (%p248) target = $region36
        $region35: #{tpu_custom_call.1} parent=11 // pred_region
          _
        $region36: #{tpu_custom_call.1} parent=11 // pred_fallthru
          _
      $region12: #{tpu_custom_call.1} parent=5 // pred_fallthru
        _
      %p251 = scmp.lt.s32.totalorder %s20, 2
      // Predicated region
      $region37: #{tpu_custom_call.1} parent=5 // pred_check
        %p252 = pneg %p251
      $region38: #{tpu_custom_call.1} parent=5 // pred_check_branch
        %254 = sbr.rel (%p252) target = $region40
      $region39: #{tpu_custom_call.1} parent=5 // pred_region
        // Predicated region
        $region41: #{tpu_custom_call.1} parent=39 // pred_check
          %p255 = pneg %p40
        $region42: #{tpu_custom_call.1} parent=39 // pred_check_branch
          %257 = sbr.rel (%p255) target = $region44
        $region43: #{tpu_custom_call.1} parent=39 // pred_region
          %s258 = sand.u32 %s30, 1
          %s259 = scalar_lea.sflag [#allocation3], %s258
          %s260 = sand.u32 %s30, 1
          %s261 = smul.addr %s260, 16
          %s262 = scalar_lea.vmem [#allocation2], %s261
          %s263 = smul.u32 2, %s20
          %s265 = ssub.s32 256, 256
          %266 = vsyncadd %s259, %s265
          %s267 = smul.addr %s263, 2
          %s268 = smul.addr %s267, 64
          %s269 = scalar_lea.hbm %s0, %s268
          %s270 = sshll.u32 %s262, 4
          %s271 = int_to_ptr.vmem [resolvable:$true] %s270
          %276 = dma.hbm_to_vmem [thread:$0]  %s269, 256, %s271, %s259, 128, 128, 8
        $region44: #{tpu_custom_call.1} parent=39 // pred_fallthru
          _
      $region40: #{tpu_custom_call.1} parent=5 // pred_fallthru
        _
      %p277 = scmp.le.s32.totalorder 1, %s20
      %p278 = scmp.lt.s32.totalorder %s20, 3
      %p279 = pnand %p277, %p278
      %p280 = pneg %p279
      // Predicated region
      $region45: #{tpu_custom_call.1} parent=5 // pred_check
        _
      $region46: #{tpu_custom_call.1} parent=5 // pred_check_branch
        %282 = sbr.rel (%p279) target = $region48
      $region47: #{tpu_custom_call.1} parent=5 // pred_region
        %s283 = ssub.s32 %s20, 1
        %s284 = sand.u32 %s33, 1
        %s285 = scalar_lea.sflag [#allocation3], %s284
        %s286 = sand.u32 %s33, 1
        %s287 = smul.addr %s286, 16
        %s288 = scalar_lea.vmem [#allocation2], %s287
        // Predicated region
        $region49: #{tpu_custom_call.1} parent=47 // pred_check
          %p289 = pneg %p46
        $region50: #{tpu_custom_call.1} parent=47 // pred_check_branch
          %291 = sbr.rel (%p289) target = $region52
        $region51: #{tpu_custom_call.1} parent=47 // pred_region
          %292 = dma.done %s285, 256
        $region52: #{tpu_custom_call.1} parent=47 // pred_fallthru
          _
        // Predicated region
        $region53: #{tpu_custom_call.1} parent=47 // pred_check
          %p293 = pneg %p109
        $region54: #{tpu_custom_call.1} parent=47 // pred_check_branch
          %295 = sbr.rel (%p293) target = $region56
        $region55: #{tpu_custom_call.1} parent=47 // pred_region
          %296 = dma.done [#allocation6], 1024
        $region56: #{tpu_custom_call.1} parent=47 // pred_fallthru
          _
        // Predicated region
        $region57: #{tpu_custom_call.1} parent=47 // pred_check
          %p297 = pneg %p130
        $region58: #{tpu_custom_call.1} parent=47 // pred_check_branch
          %299 = sbr.rel (%p297) target = $region60
        $region59: #{tpu_custom_call.1} parent=47 // pred_region
          %300 = dma.done [#allocation6], 1024
        $region60: #{tpu_custom_call.1} parent=47 // pred_fallthru
          _
        %s301 = sand.u32 %s33, 1
        %s302 = scalar_lea.sflag [#allocation3], %s301
        %s303 = sand.u32 %s33, 1
        %s304 = smul.addr %s303, 16
        %s305 = scalar_lea.vmem [#allocation2], %s304
        %p306 = pneg %p46
        %p307 = pneg %p43
        %p308 = pneg %p67
        %p309 = pneg %p64
        %p310 = pneg %p88
        %p311 = pneg %p85
        %p312 = pneg %p109
        %p313 = pneg %p106
        %p314 = pneg %p130
        %p315 = pneg %p127
        %p316 = pneg %p151
        %p317 = pneg %p148
        %p318 = pneg %p172
        %p319 = pneg %p169
        %p320 = pneg %p198
        %p321 = pneg %p195
        %s322 = sand.u32 %s185, 1
        %s323 = scalar_lea.sflag [#allocation4], %s322
        %s324 = sand.u32 %s185, 1
        %s325 = smul.addr %s324, 32
        %s326 = scalar_lea.vmem [#allocation8], %s325
        %s327 = smul.u32 2, %s25
        %s328 = smul.u32 2, %s25
        %v329 = vld [vmem:[%s1] sm:$0xff]
        %v330 = vld [vmem:[%s2] sm:$0xff]
        %v331 = vld [vmem:[%s5] sm:$0xff]
        %v332 = vld [vmem:[%s6] sm:$0xff]
        %v333 = vld [vmem:[%s288] sm:$0xff]
        %335 = vset.pattern.permute.xlu0 0
        %336 = vperm.xlu0 %335, %v330
        %v337 = vpop.permute.xlu0 %336
        %v340 = vcombine.high %v333, %v333
        %vm341 = vcmask 31744
        %v343 = vsel %vm341, %v329, 0
        %vm345 = vcmask 1043456
        %v346 = vsel %vm345, %v333, 0
        %v348 = vsel %vm345, %v340, 0
        %350 = vmatprep.subr.mxu0 0.0
        %351 = vmatpush1.msra.mxu0 0.0
        %352 = vmatprep.subr.mxu0 0.0
        %353 = vmatpush1.msra.mxu0 0.0
        %354 = vmatprep.subr.mxu0 0.0
        %355 = vmatpush1.msra.mxu0 0.0
        %356 = vmatprep.subr.mxu0 0.0
        %357 = vmatpush1.msra.mxu0 0.0
        %358 = vmatprep.subr.mxu0 0.0
        %359 = vmatpush1.msra.mxu0 0.0
        %360 = vmatprep.subr.mxu0 0.0
        %361 = vmatpush1.msra.mxu0 0.0
        %362 = vmatprep.subr.mxu0 0.0
        %363 = vmatpush1.msra.mxu0 0.0
        %364 = vmatprep.subr.mxu0 0.0
        %365 = vmatpush1.msra.mxu0 0.0
        %366 = vmatprep.subr.mxu0 0.0
        %367 = vmatpush1.msra.mxu0 0.0
        %368 = vmatprep.subr.mxu0 0.0
        %369 = vmatpush1.msra.mxu0 0.0
        %370 = vmatprep.subr.mxu0 0.0
        %371 = vmatpush1.msra.mxu0 0.0
        %372 = vmatprep.subr.mxu0 0.0
        %373 = vmatpush1.msra.mxu0 0.0
        %374 = vmatprep.subr.mxu0 0.0
        %375 = vmatpush1.msra.mxu0 0.0
        %376 = vmatprep.subr.mxu0 0.0
        %377 = vmatpush1.msra.mxu0 0.0
        %378 = vmatprep.subr.mxu0 0.0
        %379 = vmatpush1.msra.mxu0 0.0
        %380 = vmatprep.subr.mxu0 %v348
        %381 = vmatpush1.msra.mxu0 %v346
        %382 = vmatprep.subr.mxu0 0.0
        %383 = vmatpush2.msra.mxu0 0.0
        %384 = vmatprep.subr.mxu0 0.0
        %385 = vmatpush2.msra.mxu0 0.0
        %386 = vmatprep.subr.mxu0 0.0
        %387 = vmatpush2.msra.mxu0 0.0
        %388 = vmatprep.subr.mxu0 0.0
        %389 = vmatpush2.msra.mxu0 0.0
        %390 = vmatprep.subr.mxu0 0.0
        %391 = vmatpush2.msra.mxu0 0.0
        %392 = vmatprep.subr.mxu0 0.0
        %393 = vmatpush2.msra.mxu0 0.0
        %394 = vmatprep.subr.mxu0 0.0
        %395 = vmatpush2.msra.mxu0 0.0
        %396 = vmatprep.subr.mxu0 0.0
        %397 = vmatpush2.msra.mxu0 0.0
        %398 = vmatprep.subr.mxu0 0.0
        %399 = vmatpush2.msra.mxu0 0.0
        %400 = vmatprep.subr.mxu0 0.0
        %401 = vmatpush2.msra.mxu0 0.0
        %402 = vmatprep.subr.mxu0 0.0
        %403 = vmatpush2.msra.mxu0 0.0
        %404 = vmatprep.subr.mxu0 0.0
        %405 = vmatpush2.msra.mxu0 0.0
        %406 = vmatprep.subr.mxu0 0.0
        %407 = vmatpush2.msra.mxu0 0.0
        %408 = vmatprep.subr.mxu0 0.0
        %409 = vmatpush2.msra.mxu0 0.0
        %410 = vmatprep.subr.mxu0 0.0
        %411 = vmatpush2.msra.mxu0 0.0
        %412 = vmatprep.subr.mxu0 0.0
        %413 = vmatpush2.msra.mxu0 0.0
        %414 = vmatprep.mubr.f32.mxu0 0.0
        %415 = vmatmul.mubr.f32.gmra.mxu0 %v343
        %v416 = vpop.f32.mrf.mxu0
        %v417 = vadd.f32 %v337, %v416
        %v418 = vpop.f32.mrf.mxu0
        %v419 = vadd.f32 %v337, %v418
        %420 = vdwg.mxu0
        %v421 = vmax.f32 %v417, 0.0
        %v422 = vmax.f32 %v419, 0.0
        %423 = vrot.lane.b32.xlu0 %v421, 16
        %v424 = vpop.permute.xlu0 %423
        %425 = vrot.lane.b32.xlu0 %v422, 16
        %v426 = vpop.permute.xlu0 %425
        %v427 = vlaneseq
        %v428 = vand.u32 %v427, 127
        %vm429 = vcmp.lt.s32.totalorder %v428, 16
        %v430 = vsel %vm429, %v424, %v426
        %v431 = vsel %vm429, %v426, %v424
        %v432 = vld [vmem:[#allocation5] sm:$0xff]
        %v433 = vld [vmem:[#allocation5 + $0x8] sm:$0xff]
        %v434 = vmul.f32 %v432, %v431
        %v435 = vmul.f32 %v433, %v430
        %s436 = scalar_lea.vmem [#allocation5], 16
        %v437 = vld [vmem:[%s436] sm:$0xff]
        %v438 = vld [vmem:[%s436 + $0x8] sm:$0xff]
        %v439 = vmul.f32 %v437, %v421
        %v440 = vmul.f32 %v438, %v422
        %v441 = vadd.f32 %v434, %v439
        %v442 = vadd.f32 %v435, %v440
        %443 = vrot.lane.b32.xlu0 %v421, 112
        %v444 = vpop.permute.xlu0 %443
        %445 = vrot.lane.b32.xlu0 %v422, 112
        %v446 = vpop.permute.xlu0 %445
        %vm447 = vcmp.lt.s32.totalorder %v428, 112
        %v448 = vsel %vm447, %v444, %v446
        %v449 = vsel %vm447, %v446, %v444
        %s450 = scalar_lea.vmem [#allocation5], 32
        %v451 = vld [vmem:[%s450] sm:$0xff]
        %v452 = vld [vmem:[%s450 + $0x8] sm:$0xff]
        %v453 = vmul.f32 %v451, %v448
        %v454 = vmul.f32 %v452, %v449
        %v455 = vadd.f32 %v441, %v453
        %v456 = vadd.f32 %v442, %v454
        %457 = vrot.lane.b32.xlu0 %v421, 96
        %v458 = vpop.permute.xlu0 %457
        %459 = vrot.lane.b32.xlu0 %v422, 96
        %v460 = vpop.permute.xlu0 %459
        %vm461 = vcmp.lt.s32.totalorder %v428, 96
        %v462 = vsel %vm461, %v458, %v460
        %v463 = vsel %vm461, %v460, %v458
        %s464 = scalar_lea.vmem [#allocation5], 48
        %v465 = vld [vmem:[%s464] sm:$0xff]
        %v466 = vld [vmem:[%s464 + $0x8] sm:$0xff]
        %v467 = vmul.f32 %v465, %v462
        %v468 = vmul.f32 %v466, %v463
        %v469 = vadd.f32 %v455, %v467
        %v470 = vadd.f32 %v456, %v468
        %471 = vrot.lane.b32.xlu0 %v469, 1
        %v472 = vpop.permute.xlu0 %471
        %473 = vrot.lane.b32.xlu0 %v470, 1
        %v474 = vpop.permute.xlu0 %473
        %vm475 = vcmp.lt.s32.totalorder %v428, 1
        %v476 = vsel %vm475, %v472, %v474
        %v477 = vsel %vm475, %v474, %v472
        %v478 = vld [vmem:[#allocation7] sm:$0xff]
        %v479 = vld [vmem:[#allocation7 + $0x8] sm:$0xff]
        %v480 = vmul.f32 %v478, %v477
        %v481 = vmul.f32 %v479, %v476
        %s482 = scalar_lea.vmem [#allocation7], 16
        %v483 = vld [vmem:[%s482] sm:$0xff]
        %v484 = vld [vmem:[%s482 + $0x8] sm:$0xff]
        %v485 = vmul.f32 %v483, %v469
        %v486 = vmul.f32 %v484, %v470
        %v487 = vadd.f32 %v480, %v485
        %v488 = vadd.f32 %v481, %v486
        %489 = vrot.lane.b32.xlu0 %v469, 127
        %v490 = vpop.permute.xlu0 %489
        %491 = vrot.lane.b32.xlu0 %v470, 127
        %v492 = vpop.permute.xlu0 %491
        %vm493 = vcmp.lt.s32.totalorder %v428, 127
        %v494 = vsel %vm493, %v490, %v492
        %v495 = vsel %vm493, %v492, %v490
        %s496 = scalar_lea.vmem [#allocation7], 32
        %v497 = vld [vmem:[%s496] sm:$0xff]
        %v498 = vld [vmem:[%s496 + $0x8] sm:$0xff]
        %v499 = vmul.f32 %v497, %v494
        %v500 = vmul.f32 %v498, %v495
        %v501 = vadd.f32 %v487, %v499
        %v502 = vadd.f32 %v488, %v500
        %503 = vrot.lane.b32.xlu0 %v469, 126
        %v504 = vpop.permute.xlu0 %503
        %505 = vrot.lane.b32.xlu0 %v470, 126
        %v506 = vpop.permute.xlu0 %505
        %vm507 = vcmp.lt.s32.totalorder %v428, 126
        %v508 = vsel %vm507, %v504, %v506
        %v509 = vsel %vm507, %v506, %v504
        %s510 = scalar_lea.vmem [#allocation7], 48
        %v511 = vld [vmem:[%s510] sm:$0xff]
        %v512 = vld [vmem:[%s510 + $0x8] sm:$0xff]
        %v513 = vmul.f32 %v511, %v508
        %v514 = vmul.f32 %v512, %v509
        %v515 = vadd.f32 %v501, %v513
        %v516 = vadd.f32 %v502, %v514
        %518 = vset.pattern.permute.xlu0 0
        %519 = vperm.xlu0 %518, %v332
        %v520 = vpop.permute.xlu0 %519
        %vm522 = vcmask 97280
        %v524 = vsel %vm522, %v331, 0
        %526 = vmatprep.subr.mxu0 0.0
        %527 = vmatpush1.msra.mxu0 0.0
        %528 = vmatprep.subr.mxu0 0.0
        %529 = vmatpush1.msra.mxu0 0.0
        %530 = vmatprep.subr.mxu0 0.0
        %531 = vmatpush1.msra.mxu0 0.0
        %532 = vmatprep.subr.mxu0 0.0
        %533 = vmatpush1.msra.mxu0 0.0
        %534 = vmatprep.subr.mxu0 0.0
        %535 = vmatpush1.msra.mxu0 0.0
        %536 = vmatprep.subr.mxu0 0.0
        %537 = vmatpush1.msra.mxu0 0.0
        %538 = vmatprep.subr.mxu0 0.0
        %539 = vmatpush1.msra.mxu0 0.0
        %540 = vmatprep.subr.mxu0 0.0
        %541 = vmatpush1.msra.mxu0 0.0
        %542 = vmatprep.subr.mxu0 0.0
        %543 = vmatpush1.msra.mxu0 0.0
        %544 = vmatprep.subr.mxu0 0.0
        %545 = vmatpush1.msra.mxu0 0.0
        %546 = vmatprep.subr.mxu0 0.0
        %547 = vmatpush1.msra.mxu0 0.0
        %548 = vmatprep.subr.mxu0 0.0
        %549 = vmatpush1.msra.mxu0 0.0
        %550 = vmatprep.subr.mxu0 0.0
        %551 = vmatpush1.msra.mxu0 0.0
        %552 = vmatprep.subr.mxu0 0.0
        %553 = vmatpush1.msra.mxu0 0.0
        %554 = vmatprep.subr.mxu0 %v348
        %555 = vmatpush1.msra.mxu0 %v346
        %556 = vmatprep.subr.mxu0 %v516
        %557 = vmatpush1.msra.mxu0 %v515
        %558 = vmatprep.subr.mxu0 0.0
        %559 = vmatpush2.msra.mxu0 0.0
        %560 = vmatprep.subr.mxu0 0.0
        %561 = vmatpush2.msra.mxu0 0.0
        %562 = vmatprep.subr.mxu0 0.0
        %563 = vmatpush2.msra.mxu0 0.0
        %564 = vmatprep.subr.mxu0 0.0
        %565 = vmatpush2.msra.mxu0 0.0
        %566 = vmatprep.subr.mxu0 0.0
        %567 = vmatpush2.msra.mxu0 0.0
        %568 = vmatprep.subr.mxu0 0.0
        %569 = vmatpush2.msra.mxu0 0.0
        %570 = vmatprep.subr.mxu0 0.0
        %571 = vmatpush2.msra.mxu0 0.0
        %572 = vmatprep.subr.mxu0 0.0
        %573 = vmatpush2.msra.mxu0 0.0
        %574 = vmatprep.subr.mxu0 0.0
        %575 = vmatpush2.msra.mxu0 0.0
        %576 = vmatprep.subr.mxu0 0.0
        %577 = vmatpush2.msra.mxu0 0.0
        %578 = vmatprep.subr.mxu0 0.0
        %579 = vmatpush2.msra.mxu0 0.0
        %580 = vmatprep.subr.mxu0 0.0
        %581 = vmatpush2.msra.mxu0 0.0
        %582 = vmatprep.subr.mxu0 0.0
        %583 = vmatpush2.msra.mxu0 0.0
        %584 = vmatprep.subr.mxu0 0.0
        %585 = vmatpush2.msra.mxu0 0.0
        %586 = vmatprep.subr.mxu0 0.0
        %587 = vmatpush2.msra.mxu0 0.0
        %588 = vmatprep.subr.mxu0 0.0
        %589 = vmatpush2.msra.mxu0 0.0
        %590 = vmatprep.mubr.f32.mxu0 0.0
        %591 = vmatmul.mubr.f32.gmra.mxu0 %v524
        %v592 = vpop.f32.mrf.mxu0
        %v593 = vadd.f32 %v520, %v592
        %v594 = vpop.f32.mrf.mxu0
        %v595 = vadd.f32 %v520, %v594
        %596 = vdwg.mxu0
        %597 = vst [vmem:[%s326] sm:$0xff] %v593
        %598 = vst [vmem:[%s326 + $0x8] sm:$0xff] %v595
        %s599 = scalar_lea.vmem %s288, 8 [#allocation2]
        %v600 = vld [vmem:[%s599] sm:$0xff]
        %v602 = vcombine.high %v600, %v600
        %v603 = vsel %vm345, %v600, 0
        %v605 = vsel %vm345, %v602, 0
        %607 = vmatprep.subr.mxu0 0.0
        %608 = vmatpush1.msra.mxu0 0.0
        %609 = vmatprep.subr.mxu0 0.0
        %610 = vmatpush1.msra.mxu0 0.0
        %611 = vmatprep.subr.mxu0 0.0
        %612 = vmatpush1.msra.mxu0 0.0
        %613 = vmatprep.subr.mxu0 0.0
        %614 = vmatpush1.msra.mxu0 0.0
        %615 = vmatprep.subr.mxu0 0.0
        %616 = vmatpush1.msra.mxu0 0.0
        %617 = vmatprep.subr.mxu0 0.0
        %618 = vmatpush1.msra.mxu0 0.0
        %619 = vmatprep.subr.mxu0 0.0
        %620 = vmatpush1.msra.mxu0 0.0
        %621 = vmatprep.subr.mxu0 0.0
        %622 = vmatpush1.msra.mxu0 0.0
        %623 = vmatprep.subr.mxu0 0.0
        %624 = vmatpush1.msra.mxu0 0.0
        %625 = vmatprep.subr.mxu0 0.0
        %626 = vmatpush1.msra.mxu0 0.0
        %627 = vmatprep.subr.mxu0 0.0
        %628 = vmatpush1.msra.mxu0 0.0
        %629 = vmatprep.subr.mxu0 0.0
        %630 = vmatpush1.msra.mxu0 0.0
        %631 = vmatprep.subr.mxu0 0.0
        %632 = vmatpush1.msra.mxu0 0.0
        %633 = vmatprep.subr.mxu0 0.0
        %634 = vmatpush1.msra.mxu0 0.0
        %635 = vmatprep.subr.mxu0 0.0
        %636 = vmatpush1.msra.mxu0 0.0
        %637 = vmatprep.subr.mxu0 %v605
        %638 = vmatpush1.msra.mxu0 %v603
        %639 = vmatprep.subr.mxu0 0.0
        %640 = vmatpush2.msra.mxu0 0.0
        %641 = vmatprep.subr.mxu0 0.0
        %642 = vmatpush2.msra.mxu0 0.0
        %643 = vmatprep.subr.mxu0 0.0
        %644 = vmatpush2.msra.mxu0 0.0
        %645 = vmatprep.subr.mxu0 0.0
        %646 = vmatpush2.msra.mxu0 0.0
        %647 = vmatprep.subr.mxu0 0.0
        %648 = vmatpush2.msra.mxu0 0.0
        %649 = vmatprep.subr.mxu0 0.0
        %650 = vmatpush2.msra.mxu0 0.0
        %651 = vmatprep.subr.mxu0 0.0
        %652 = vmatpush2.msra.mxu0 0.0
        %653 = vmatprep.subr.mxu0 0.0
        %654 = vmatpush2.msra.mxu0 0.0
        %655 = vmatprep.subr.mxu0 0.0
        %656 = vmatpush2.msra.mxu0 0.0
        %657 = vmatprep.subr.mxu0 0.0
        %658 = vmatpush2.msra.mxu0 0.0
        %659 = vmatprep.subr.mxu0 0.0
        %660 = vmatpush2.msra.mxu0 0.0
        %661 = vmatprep.subr.mxu0 0.0
        %662 = vmatpush2.msra.mxu0 0.0
        %663 = vmatprep.subr.mxu0 0.0
        %664 = vmatpush2.msra.mxu0 0.0
        %665 = vmatprep.subr.mxu0 0.0
        %666 = vmatpush2.msra.mxu0 0.0
        %667 = vmatprep.subr.mxu0 0.0
        %668 = vmatpush2.msra.mxu0 0.0
        %669 = vmatprep.subr.mxu0 0.0
        %670 = vmatpush2.msra.mxu0 0.0
        %671 = vmatprep.mubr.f32.mxu0 0.0
        %672 = vmatmul.mubr.f32.gmra.mxu0 %v343
        %v673 = vpop.f32.mrf.mxu0
        %v674 = vadd.f32 %v337, %v673
        %v675 = vpop.f32.mrf.mxu0
        %v676 = vadd.f32 %v337, %v675
        %677 = vdwg.mxu0
        %v678 = vmax.f32 %v674, 0.0
        %v679 = vmax.f32 %v676, 0.0
        %680 = vrot.lane.b32.xlu0 %v678, 16
        %v681 = vpop.permute.xlu0 %680
        %682 = vrot.lane.b32.xlu0 %v679, 16
        %v683 = vpop.permute.xlu0 %682
        %v684 = vsel %vm429, %v681, %v683
        %v685 = vsel %vm429, %v683, %v681
        %v686 = vld [vmem:[#allocation5] sm:$0xff]
        %v687 = vld [vmem:[#allocation5 + $0x8] sm:$0xff]
        %v688 = vmul.f32 %v686, %v685
        %v689 = vmul.f32 %v687, %v684
        %v690 = vld [vmem:[%s436] sm:$0xff]
        %v691 = vld [vmem:[%s436 + $0x8] sm:$0xff]
        %v692 = vmul.f32 %v690, %v678
        %v693 = vmul.f32 %v691, %v679
        %v694 = vadd.f32 %v688, %v692
        %v695 = vadd.f32 %v689, %v693
        %696 = vrot.lane.b32.xlu0 %v678, 112
        %v697 = vpop.permute.xlu0 %696
        %698 = vrot.lane.b32.xlu0 %v679, 112
        %v699 = vpop.permute.xlu0 %698
        %v700 = vsel %vm447, %v697, %v699
        %v701 = vsel %vm447, %v699, %v697
        %v702 = vld [vmem:[%s450] sm:$0xff]
        %v703 = vld [vmem:[%s450 + $0x8] sm:$0xff]
        %v704 = vmul.f32 %v702, %v700
        %v705 = vmul.f32 %v703, %v701
        %v706 = vadd.f32 %v694, %v704
        %v707 = vadd.f32 %v695, %v705
        %708 = vrot.lane.b32.xlu0 %v678, 96
        %v709 = vpop.permute.xlu0 %708
        %710 = vrot.lane.b32.xlu0 %v679, 96
        %v711 = vpop.permute.xlu0 %710
        %v712 = vsel %vm461, %v709, %v711
        %v713 = vsel %vm461, %v711, %v709
        %v714 = vld [vmem:[%s464] sm:$0xff]
        %v715 = vld [vmem:[%s464 + $0x8] sm:$0xff]
        %v716 = vmul.f32 %v714, %v712
        %v717 = vmul.f32 %v715, %v713
        %v718 = vadd.f32 %v706, %v716
        %v719 = vadd.f32 %v707, %v717
        %720 = vrot.lane.b32.xlu0 %v718, 1
        %v721 = vpop.permute.xlu0 %720
        %722 = vrot.lane.b32.xlu0 %v719, 1
        %v723 = vpop.permute.xlu0 %722
        %v724 = vsel %vm475, %v721, %v723
        %v725 = vsel %vm475, %v723, %v721
        %v726 = vld [vmem:[#allocation7] sm:$0xff]
        %v727 = vld [vmem:[#allocation7 + $0x8] sm:$0xff]
        %v728 = vmul.f32 %v726, %v725
        %v729 = vmul.f32 %v727, %v724
        %v730 = vld [vmem:[%s482] sm:$0xff]
        %v731 = vld [vmem:[%s482 + $0x8] sm:$0xff]
        %v732 = vmul.f32 %v730, %v718
        %v733 = vmul.f32 %v731, %v719
        %v734 = vadd.f32 %v728, %v732
        %v735 = vadd.f32 %v729, %v733
        %736 = vrot.lane.b32.xlu0 %v718, 127
        %v737 = vpop.permute.xlu0 %736
        %738 = vrot.lane.b32.xlu0 %v719, 127
        %v739 = vpop.permute.xlu0 %738
        %v740 = vsel %vm493, %v737, %v739
        %v741 = vsel %vm493, %v739, %v737
        %v742 = vld [vmem:[%s496] sm:$0xff]
        %v743 = vld [vmem:[%s496 + $0x8] sm:$0xff]
        %v744 = vmul.f32 %v742, %v740
        %v745 = vmul.f32 %v743, %v741
        %v746 = vadd.f32 %v734, %v744
        %v747 = vadd.f32 %v735, %v745
        %748 = vrot.lane.b32.xlu0 %v718, 126
        %v749 = vpop.permute.xlu0 %748
        %750 = vrot.lane.b32.xlu0 %v719, 126
        %v751 = vpop.permute.xlu0 %750
        %v752 = vsel %vm507, %v749, %v751
        %v753 = vsel %vm507, %v751, %v749
        %v754 = vld [vmem:[%s510] sm:$0xff]
        %v755 = vld [vmem:[%s510 + $0x8] sm:$0xff]
        %v756 = vmul.f32 %v754, %v752
        %v757 = vmul.f32 %v755, %v753
        %v758 = vadd.f32 %v746, %v756
        %v759 = vadd.f32 %v747, %v757
        %760 = vmatprep.subr.mxu0 0.0
        %761 = vmatpush1.msra.mxu0 0.0
        %762 = vmatprep.subr.mxu0 0.0
        %763 = vmatpush1.msra.mxu0 0.0
        %764 = vmatprep.subr.mxu0 0.0
        %765 = vmatpush1.msra.mxu0 0.0
        %766 = vmatprep.subr.mxu0 0.0
        %767 = vmatpush1.msra.mxu0 0.0
        %768 = vmatprep.subr.mxu0 0.0
        %769 = vmatpush1.msra.mxu0 0.0
        %770 = vmatprep.subr.mxu0 0.0
        %771 = vmatpush1.msra.mxu0 0.0
        %772 = vmatprep.subr.mxu0 0.0
        %773 = vmatpush1.msra.mxu0 0.0
        %774 = vmatprep.subr.mxu0 0.0
        %775 = vmatpush1.msra.mxu0 0.0
        %776 = vmatprep.subr.mxu0 0.0
        %777 = vmatpush1.msra.mxu0 0.0
        %778 = vmatprep.subr.mxu0 0.0
        %779 = vmatpush1.msra.mxu0 0.0
        %780 = vmatprep.subr.mxu0 0.0
        %781 = vmatpush1.msra.mxu0 0.0
        %782 = vmatprep.subr.mxu0 0.0
        %783 = vmatpush1.msra.mxu0 0.0
        %784 = vmatprep.subr.mxu0 0.0
        %785 = vmatpush1.msra.mxu0 0.0
        %786 = vmatprep.subr.mxu0 0.0
        %787 = vmatpush1.msra.mxu0 0.0
        %788 = vmatprep.subr.mxu0 %v605
        %789 = vmatpush1.msra.mxu0 %v603
        %790 = vmatprep.subr.mxu0 %v759
        %791 = vmatpush1.msra.mxu0 %v758
        %792 = vmatprep.subr.mxu0 0.0
        %793 = vmatpush2.msra.mxu0 0.0
        %794 = vmatprep.subr.mxu0 0.0
        %795 = vmatpush2.msra.mxu0 0.0
        %796 = vmatprep.subr.mxu0 0.0
        %797 = vmatpush2.msra.mxu0 0.0
        %798 = vmatprep.subr.mxu0 0.0
        %799 = vmatpush2.msra.mxu0 0.0
        %800 = vmatprep.subr.mxu0 0.0
        %801 = vmatpush2.msra.mxu0 0.0
        %802 = vmatprep.subr.mxu0 0.0
        %803 = vmatpush2.msra.mxu0 0.0
        %804 = vmatprep.subr.mxu0 0.0
        %805 = vmatpush2.msra.mxu0 0.0
        %806 = vmatprep.subr.mxu0 0.0
        %807 = vmatpush2.msra.mxu0 0.0
        %808 = vmatprep.subr.mxu0 0.0
        %809 = vmatpush2.msra.mxu0 0.0
        %810 = vmatprep.subr.mxu0 0.0
        %811 = vmatpush2.msra.mxu0 0.0
        %812 = vmatprep.subr.mxu0 0.0
        %813 = vmatpush2.msra.mxu0 0.0
        %814 = vmatprep.subr.mxu0 0.0
        %815 = vmatpush2.msra.mxu0 0.0
        %816 = vmatprep.subr.mxu0 0.0
        %817 = vmatpush2.msra.mxu0 0.0
        %818 = vmatprep.subr.mxu0 0.0
        %819 = vmatpush2.msra.mxu0 0.0
        %820 = vmatprep.subr.mxu0 0.0
        %821 = vmatpush2.msra.mxu0 0.0
        %822 = vmatprep.subr.mxu0 0.0
        %823 = vmatpush2.msra.mxu0 0.0
        %824 = vmatprep.mubr.f32.mxu0 0.0
        %825 = vmatmul.mubr.f32.gmra.mxu0 %v524
        %v826 = vpop.f32.mrf.mxu0
        %v827 = vadd.f32 %v520, %v826
        %v828 = vpop.f32.mrf.mxu0
        %v829 = vadd.f32 %v520, %v828
        %830 = vdwg.mxu0
        %s831 = scalar_lea.vmem %s326, 16 [#allocation8]
        %832 = vst [vmem:[%s831] sm:$0xff] %v827
        %833 = vst [vmem:[%s831 + $0x8] sm:$0xff] %v829
        %s834 = sand.u32 %s185, 1
        %s835 = scalar_lea.sflag [#allocation4], %s834
        %s836 = sand.u32 %s185, 1
        %s837 = smul.addr %s836, 32
        %s838 = scalar_lea.vmem [#allocation8], %s837
        // Predicated region
        $region61: #{tpu_custom_call.1} parent=47 // pred_check
          %p839 = pneg %p195
        $region62: #{tpu_custom_call.1} parent=47 // pred_check_branch
          %841 = sbr.rel (%p839) target = $region64
        $region63: #{tpu_custom_call.1} parent=47 // pred_region
          %s842 = smul.u32 2, %s25
          %s844 = ssub.s32 512, 512
          %845 = vsyncadd %s835, %s844
          %s846 = smul.addr %s842, 2
          %s847 = smul.addr %s846, 128
          %s848 = scalar_lea.hbm %s7, %s847
          %s849 = sshll.u32 %s838, 4
          %s850 = int_to_ptr.vmem [resolvable:$true] %s849
          %855 = dma.vmem_to_hbm [thread:$0]  %s850, 512, %s848, %s835, 256, 256, 16
        $region64: #{tpu_custom_call.1} parent=47 // pred_fallthru
          _
      $region48: #{tpu_custom_call.1} parent=5 // pred_fallthru
        _
      %p856 = scmp.le.s32.totalorder 2, %s20
      // Predicated region
      $region65: #{tpu_custom_call.1} parent=5 // pred_check
        %p857 = pneg %p856
      $region66: #{tpu_custom_call.1} parent=5 // pred_check_branch
        %859 = sbr.rel (%p857) target = $region68
      $region67: #{tpu_custom_call.1} parent=5 // pred_region
        %s860 = ssub.s32 %s20, 2
        // Predicated region
        $region69: #{tpu_custom_call.1} parent=67 // pred_check
          %p861 = pneg %p201
        $region70: #{tpu_custom_call.1} parent=67 // pred_check_branch
          %863 = sbr.rel (%p861) target = $region72
        $region71: #{tpu_custom_call.1} parent=67 // pred_region
          %s864 = sand.u32 %s186, 1
          %s865 = scalar_lea.sflag [#allocation4], %s864
          %s866 = sand.u32 %s186, 1
          %s867 = smul.addr %s866, 32
          %s868 = scalar_lea.vmem [#allocation8], %s867
          %869 = dma.done %s865, 512
        $region72: #{tpu_custom_call.1} parent=67 // pred_fallthru
          _
      $region68: #{tpu_custom_call.1} parent=5 // pred_fallthru
        _
    $region6: #{tpu_custom_call.1} parent=1 // loop_footer
      %s24 = sadd.s32 1, %s20
    $region7: #{tpu_custom_call.1} parent=1 // loop_footer_branch
      %19 = sbr.rel target = $region3
    $region8: #{tpu_custom_call.1} parent=1 // loop_exit
      _
    %870 = vsyncpa [#allocation3], 1
    %s871 = scalar_lea.sflag [#allocation3], 1
    %872 = vsyncpa %s871, 1
    %873 = vsyncpa [#allocation6], 1
    %874 = vsyncpa [#allocation4], 1
    %s875 = scalar_lea.sflag [#allocation4], 1
    %876 = vsyncpa %s875, 1

</llo_original>
